<compile_context>
chip_gen: v6e
topology: v6e:2x2x1
jax: 0.10.0
libtpu: 0.0.40
codegen_flags: <defaults>
</compile_context>

<pallas_src>
from functools import partial

import jax
import jax.numpy as jnp
from jax.experimental import pallas as pl
from jax.experimental.pallas import tpu as pltpu


def _round_up(n, m):
    return ((n + m - 1) // m) * m


def _mlp_kernel(xt_ref, w1_ref, b1_ref, w2_ref, b2_ref, w3_ref, b3_ref, o_ref,
                *, compute_dtype):
    cd = compute_dtype
    xt = xt_ref[...].astype(cd)                                   # (D, tile_m)

    # Layer 1: Linear(input_dim, 64) + ReLU     -> (64, tile_m), f32 accumulate
    h1 = jnp.dot(w1_ref[...].astype(cd), xt,
                 preferred_element_type=jnp.float32)
    h1 = jnp.maximum(h1 + b1_ref[...], 0.0)

    # Layer 2: Linear(64, 64) + ReLU            -> (64, tile_m)
    h2 = jnp.dot(w2_ref[...].astype(cd), h1.astype(cd),
                 preferred_element_type=jnp.float32)
    h2 = jnp.maximum(h2 + b2_ref[...], 0.0)

    # Layer 3: Linear(64, 1) as VPU multiply + sublane (XLU) reduce.
    # Keeps the N=1 matmul off the MXU; result is already lane-dense (1, tile_m).
    y = jnp.sum(h2 * w3_ref[...], axis=0, keepdims=True) + b3_ref[0]
    o_ref[...] = y.astype(o_ref.dtype)


def mlp_forward(x, params, *, tile_m=512, compute_dtype=jnp.bfloat16):
    """x: [B, input_dim] float32 -> [B, 1] float32."""
    w1, b1, w2, b2, w3, b3 = params
    B, D = x.shape
    H = w1.shape[0]

    # Lane-dense tiles: tile_m must be a multiple of 128; don't tile far past B.
    tile_m = max(128, _round_up(min(tile_m, B), 128))
    B_pad = _round_up(B, tile_m)
    if B_pad != B:
        x = jnp.pad(x, ((0, B_pad - B), (0, 0)))

    # Wrapper-side layout plumbing: present the batch on the lane axis.
    xt = x.T                                                      # (D, B_pad)

    grid = (B_pad // tile_m,)

    out_t = pl.pallas_call(
        partial(_mlp_kernel, compute_dtype=compute_dtype),
        out_shape=jax.ShapeDtypeStruct((1, B_pad), jnp.float32),
        grid_spec=pltpu.PrefetchScalarGridSpec(
            num_scalar_prefetch=0,
            grid=grid,
            in_specs=[
                pl.BlockSpec((D, tile_m), lambda i: (0, i)),   # x^T tile
                pl.BlockSpec((H, D),      lambda i: (0, 0)),   # w1 (resident)
                pl.BlockSpec((H, 1),      lambda i: (0, 0)),   # b1
                pl.BlockSpec((H, H),      lambda i: (0, 0)),   # w2
                pl.BlockSpec((H, 1),      lambda i: (0, 0)),   # b2
                pl.BlockSpec((H, 1),      lambda i: (0, 0)),   # w3 (column)
                pl.BlockSpec(memory_space=pltpu.MemorySpace.SMEM),  # b3 scalar
            ],
            out_specs=pl.BlockSpec((1, tile_m), lambda i: (0, i)),  # lane-dense
        ),
        compiler_params=pltpu.CompilerParams(
            dimension_semantics=("parallel",)),
    )(xt, w1, b1, w2, b2, w3, b3)

    return out_t.reshape(B_pad, 1)[:B]


def xavier_uniform(key, shape, fan_in, fan_out):
    # Matches nn.init.xavier_uniform_: U(-a, a), a = sqrt(6 / (fan_in + fan_out))
    bound = (6.0 / (fan_in + fan_out)) ** 0.5
    return jax.random.uniform(key, shape, jnp.float32, minval=-bound, maxval=bound)


def init_params(key, input_dim, hidden=64):
    k1, k2, k3 = jax.random.split(key, 3)
    # PyTorch layout: weight (out_features, in_features); biases as columns.
    w1 = xavier_uniform(k1, (hidden, input_dim), input_dim, hidden)   # (H, D)
    b1 = jnp.zeros((hidden, 1), jnp.float32)
    w2 = xavier_uniform(k2, (hidden, hidden), hidden, hidden)         # (H, H)
    b2 = jnp.zeros((hidden, 1), jnp.float32)
    w3 = xavier_uniform(k3, (hidden, 1), hidden, 1)                   # (H, 1)
    b3 = jnp.zeros((1,), jnp.float32)
    return (w1, b1, w2, b2, w3, b3)


def mlp_reference(x, params):
    w1, b1, w2, b2, w3, b3 = params
    h1 = jnp.maximum(x @ w1.T + b1[:, 0], 0.0)
    h2 = jnp.maximum(h1 @ w2.T + b2[:, 0], 0.0)
    return h2 @ w3 + b3


if __name__ == "__main__":
    key = jax.random.PRNGKey(0)
    k_param, k_x = jax.random.split(key)

    batch, input_dim = 16, 32
    params = init_params(k_param, input_dim)
    x = jax.random.normal(k_x, (batch, input_dim), jnp.float32)

    ref = mlp_reference(x, params)

    # Pure-f32 path: exact match with the reference.
    out_f32 = jax.block_until_ready(
        mlp_forward(x, params, compute_dtype=jnp.float32))
    assert out_f32.shape == (batch, 1)
    assert jnp.allclose(out_f32, ref, atol=1e-5, rtol=1e-5)

    # Default bf16-MXU path (f32 accumulation): looser tolerance.
    out_bf16 = jax.block_until_ready(mlp_forward(x, params))
    assert out_bf16.shape == (batch, 1)
    assert jnp.allclose(out_bf16, ref, atol=5e-2, rtol=5e-2)

    print("KERNEL_OK")
</pallas_src>

<mosaic_0001>
module attributes {stable_mosaic.version = 11 : i64} {
  func.func @_mlp_kernel(%arg0: i32, %arg1: memref<32x128xf32, #tpu.memory_space<vmem>>, %arg2: memref<64x32xf32, #tpu.memory_space<vmem>>, %arg3: memref<64x1xf32, #tpu.memory_space<vmem>>, %arg4: memref<64x64xf32, #tpu.memory_space<vmem>>, %arg5: memref<64x1xf32, #tpu.memory_space<vmem>>, %arg6: memref<64x1xf32, #tpu.memory_space<vmem>>, %arg7: memref<1xf32, #tpu.memory_space<smem>>, %arg8: memref<1x128xf32, #tpu.memory_space<vmem>>) attributes {dimension_semantics = [#tpu.dimension_semantics<parallel>], iteration_bounds = array<i64: 1>, scalar_prefetch = 0 : i64, scratch_operands = 0 : i64, tpu.core_type = #tpu.core_type<tc>, window_params = [{transform_indices = @transform_0, window_bounds = array<i64: 32, 128>}, {pipeline_mode = #tpu.pipeline_mode<synchronous>, transform_indices = @transform_1, window_bounds = array<i64: 64, 32>}, {pipeline_mode = #tpu.pipeline_mode<synchronous>, transform_indices = @transform_2, window_bounds = array<i64: 64, 1>}, {pipeline_mode = #tpu.pipeline_mode<synchronous>, transform_indices = @transform_3, window_bounds = array<i64: 64, 64>}, {pipeline_mode = #tpu.pipeline_mode<synchronous>, transform_indices = @transform_4, window_bounds = array<i64: 64, 1>}, {pipeline_mode = #tpu.pipeline_mode<synchronous>, transform_indices = @transform_5, window_bounds = array<i64: 64, 1>}, {transform_indices = @transform_6, window_bounds = array<i64: 1>}, {transform_indices = @transform_7, window_bounds = array<i64: 1, 128>}]} {
    %c0 = arith.constant 0 : index
    %c0_0 = arith.constant 0 : index
    %0 = vector.load %arg1[%c0, %c0_0] : memref<32x128xf32, #tpu.memory_space<vmem>>, vector<32x128xf32>
    %c0_1 = arith.constant 0 : index
    %c0_2 = arith.constant 0 : index
    %1 = vector.load %arg2[%c0_1, %c0_2] : memref<64x32xf32, #tpu.memory_space<vmem>>, vector<64x32xf32>
    %cst = arith.constant dense<0.000000e+00> : vector<64x128xf32>
    %2 = tpu.matmul %1, %0, %cst {dimension_numbers = #tpu.dot_dimension_numbers<[1], [0], [0], [1], [0, 0, 1, 1], [], []>} : vector<64x32xf32>, vector<32x128xf32>, vector<64x128xf32> -> vector<64x128xf32>
    %c0_3 = arith.constant 0 : index
    %c0_4 = arith.constant 0 : index
    %3 = vector.load %arg3[%c0_3, %c0_4] : memref<64x1xf32, #tpu.memory_space<vmem>>, vector<64x1xf32>
    %4 = vector.broadcast %3 : vector<64x1xf32> to vector<64x128xf32>
    %5 = arith.addf %2, %4 : vector<64x128xf32>
    %cst_5 = arith.constant 0.000000e+00 : f32
    %6 = vector.broadcast %cst_5 : f32 to vector<64x128xf32>
    %7 = arith.maximumf %5, %6 : vector<64x128xf32>
    %c0_6 = arith.constant 0 : index
    %c0_7 = arith.constant 0 : index
    %8 = vector.load %arg4[%c0_6, %c0_7] : memref<64x64xf32, #tpu.memory_space<vmem>>, vector<64x64xf32>
    %cst_8 = arith.constant dense<0.000000e+00> : vector<64x128xf32>
    %9 = tpu.matmul %8, %7, %cst_8 {dimension_numbers = #tpu.dot_dimension_numbers<[1], [0], [0], [1], [0, 0, 1, 1], [], []>} : vector<64x64xf32>, vector<64x128xf32>, vector<64x128xf32> -> vector<64x128xf32>
    %c0_9 = arith.constant 0 : index
    %c0_10 = arith.constant 0 : index
    %10 = vector.load %arg5[%c0_9, %c0_10] : memref<64x1xf32, #tpu.memory_space<vmem>>, vector<64x1xf32>
    %11 = vector.broadcast %10 : vector<64x1xf32> to vector<64x128xf32>
    %12 = arith.addf %9, %11 : vector<64x128xf32>
    %cst_11 = arith.constant 0.000000e+00 : f32
    %13 = vector.broadcast %cst_11 : f32 to vector<64x128xf32>
    %14 = arith.maximumf %12, %13 : vector<64x128xf32>
    %c0_12 = arith.constant 0 : index
    %c0_13 = arith.constant 0 : index
    %15 = vector.load %arg6[%c0_12, %c0_13] : memref<64x1xf32, #tpu.memory_space<vmem>>, vector<64x1xf32>
    %16 = vector.broadcast %15 : vector<64x1xf32> to vector<64x128xf32>
    %17 = arith.mulf %14, %16 : vector<64x128xf32>
    %cst_14 = arith.constant dense<0.000000e+00> : vector<128xf32>
    %18 = vector.multi_reduction <add>, %17, %cst_14 [0] : vector<64x128xf32> to vector<128xf32>
    %19 = vector.shape_cast %18 : vector<128xf32> to vector<1x128xf32>
    %c0_15 = arith.constant 0 : index
    %20 = memref.load %arg7[%c0_15] : memref<1xf32, #tpu.memory_space<smem>>
    %21 = vector.broadcast %20 : f32 to vector<1x128xf32>
    %22 = arith.addf %19, %21 : vector<1x128xf32>
    %c0_16 = arith.constant 0 : index
    %c0_17 = arith.constant 0 : index
    %23 = vector.load %arg8[%c0_16, %c0_17] : memref<1x128xf32, #tpu.memory_space<vmem>>, vector<1x128xf32>
    tpu.vector_store %arg8[%c0_16, %c0_17], %22 {strides = array<i32>} : memref<1x128xf32, #tpu.memory_space<vmem>>, vector<1x128xf32>,
    return
  }
  func.func @transform_0(%arg0: i32) -> (i32, i32) {
    %c0_i32 = arith.constant 0 : i32
    %c0_i32_0 = arith.constant 0 : i32
    return %c0_i32, %arg0 : i32, i32
  }
  func.func @transform_1(%arg0: i32) -> (i32, i32) {
    %c0_i32 = arith.constant 0 : i32
    %c0_i32_0 = arith.constant 0 : i32
    %c0_i32_1 = arith.constant 0 : i32
    return %c0_i32, %c0_i32_0 : i32, i32
  }
  func.func @transform_2(%arg0: i32) -> (i32, i32) {
    %c0_i32 = arith.constant 0 : i32
    %c0_i32_0 = arith.constant 0 : i32
    %c0_i32_1 = arith.constant 0 : i32
    return %c0_i32, %c0_i32_0 : i32, i32
  }
  func.func @transform_3(%arg0: i32) -> (i32, i32) {
    %c0_i32 = arith.constant 0 : i32
    %c0_i32_0 = arith.constant 0 : i32
    %c0_i32_1 = arith.constant 0 : i32
    return %c0_i32, %c0_i32_0 : i32, i32
  }
  func.func @transform_4(%arg0: i32) -> (i32, i32) {
    %c0_i32 = arith.constant 0 : i32
    %c0_i32_0 = arith.constant 0 : i32
    %c0_i32_1 = arith.constant 0 : i32
    return %c0_i32, %c0_i32_0 : i32, i32
  }
  func.func @transform_5(%arg0: i32) -> (i32, i32) {
    %c0_i32 = arith.constant 0 : i32
    %c0_i32_0 = arith.constant 0 : i32
    %c0_i32_1 = arith.constant 0 : i32
    return %c0_i32, %c0_i32_0 : i32, i32
  }
  func.func @transform_6(%arg0: i32) -> i32 {
    %c0_i32 = arith.constant 0 : i32
    %c0_i32_0 = arith.constant 0 : i32
    return %c0_i32 : i32
  }
  func.func @transform_7(%arg0: i32) -> (i32, i32) {
    %c0_i32 = arith.constant 0 : i32
    %c0_i32_0 = arith.constant 0 : i32
    return %c0_i32, %arg0 : i32, i32
  }
}

</mosaic_0001>

<llo_original>
// kernel: tpu_custom_call.1
$region0: #{tpu_custom_call.1}
  #allocation0 [shape = 'u32[]', space=smem, size = 0x4, offset = 0x4, fixed_abs, tag = 'smem constant byte address 0x4 - core index']
  #allocation1 [shape = 'u32[144,128]{1,0:T(1,128)}', space=vmem, size = 0x12000, scoped, tag = 'internal scratch']
  #allocation2 [shape = 'f32[1]{0:T(128)S(6)}', space=smem, size = 0x200, scoped, tag = 'scoped memory for tpu_custom_call.1']
  %s0 = inlined_call_operand.vmem [shape: f32[32,128], index: 0, kind: input, shape index: {}]
  %s1 = inlined_call_operand.vmem [shape: f32[64,32], index: 1, kind: input, shape index: {}]
  %s2 = inlined_call_operand.vmem [shape: f32[64,1], index: 2, kind: input, shape index: {}]
  %s3 = inlined_call_operand.vmem [shape: f32[64,64], index: 3, kind: input, shape index: {}]
  %s4 = inlined_call_operand.vmem [shape: f32[64,1], index: 4, kind: input, shape index: {}]
  %s5 = inlined_call_operand.vmem [shape: f32[64,1], index: 5, kind: input, shape index: {}]
  %s6 = inlined_call_operand.<no memory space> [shape: f32[1], index: 6, kind: input, shape index: {}]
  %s7 = inlined_call_operand.hbm [shape: f32[1,128], index: 7, kind: output, shape index: {}]
  %s8 = sld [smem:[#allocation0]]
  $region38: #{tpu_custom_call.1} parent=0
    _
  %s10 = ssub.s32 1, %s8
  %s11 = scalar_select 0, %s10, %s8
  %12 = sst [smem:[#allocation2]] %s6
  $region1: #{tpu_custom_call.1} parent=0
    #allocation3 [shape = 'u8[512]{0}', space=vmem, size = 0x400, scoped, tag = 'output window, operand 0, single buffered']
    #allocation4 [shape = 's32[1]{0}', space=sflag, size = 0x4, scoped, tag = 'scoped memory for tpu_custom_call.1']
    %13 = vsyncpa [#allocation4], 0
    // Predicated region
    $region2: #{tpu_custom_call.1} parent=1 // pred_check
      _
    $region3: #{tpu_custom_call.1} parent=1 // pred_check_branch
      %15 = sbr.rel (0) target = $region5
    $region4: #{tpu_custom_call.1} parent=1 // pred_region
      _
    $region5: #{tpu_custom_call.1} parent=1 // pred_fallthru
      _
    // Predicated region
    $region6: #{tpu_custom_call.1} parent=1 // pred_check
      _
    $region7: #{tpu_custom_call.1} parent=1 // pred_check_branch
      %17 = sbr.rel (0) target = $region9
    $region8: #{tpu_custom_call.1} parent=1 // pred_region
      _
    $region9: #{tpu_custom_call.1} parent=1 // pred_fallthru
      _
    // Predicated region
    $region10: #{tpu_custom_call.1} parent=1 // pred_check
      _
    $region11: #{tpu_custom_call.1} parent=1 // pred_check_branch
      %19 = sbr.rel (0) target = $region13
    $region12: #{tpu_custom_call.1} parent=1 // pred_region
      _
    $region13: #{tpu_custom_call.1} parent=1 // pred_fallthru
      _
    // Predicated region
    $region14: #{tpu_custom_call.1} parent=1 // pred_check
      _
    $region15: #{tpu_custom_call.1} parent=1 // pred_check_branch
      %21 = sbr.rel (0) target = $region17
    $region16: #{tpu_custom_call.1} parent=1 // pred_region
      _
    $region17: #{tpu_custom_call.1} parent=1 // pred_fallthru
      _
    // Predicated region
    $region18: #{tpu_custom_call.1} parent=1 // pred_check
      _
    $region19: #{tpu_custom_call.1} parent=1 // pred_check_branch
      %23 = sbr.rel (0) target = $region21
    $region20: #{tpu_custom_call.1} parent=1 // pred_region
      _
    $region21: #{tpu_custom_call.1} parent=1 // pred_fallthru
      _
    // Predicated region
    $region22: #{tpu_custom_call.1} parent=1 // pred_check
      _
    $region23: #{tpu_custom_call.1} parent=1 // pred_check_branch
      %25 = sbr.rel (0) target = $region25
    $region24: #{tpu_custom_call.1} parent=1 // pred_region
      _
    $region25: #{tpu_custom_call.1} parent=1 // pred_fallthru
      _
    // Predicated region
    $region26: #{tpu_custom_call.1} parent=1 // pred_check
      _
    $region27: #{tpu_custom_call.1} parent=1 // pred_check_branch
      %27 = sbr.rel (0) target = $region29
    $region28: #{tpu_custom_call.1} parent=1 // pred_region
      _
    $region29: #{tpu_custom_call.1} parent=1 // pred_fallthru
      _
    %v28 = vld [vmem:[%s0] sm:$0xff]
    %v29 = vld [vmem:[%s0 + $0x8] sm:$0xff]
    %v30 = vld [vmem:[%s0 + $0x10] sm:$0xff]
    %v31 = vld [vmem:[%s0 + $0x18] sm:$0xff]
    %v32 = vld [vmem:[%s1] sm:$0xff]
    %v33 = vld [vmem:[%s1 + $0x8] sm:$0xff]
    %v34 = vld [vmem:[%s1 + $0x10] sm:$0xff]
    %v35 = vld [vmem:[%s1 + $0x18] sm:$0xff]
    %v36 = vld [vmem:[%s1 + $0x20] sm:$0xff]
    %v37 = vld [vmem:[%s1 + $0x28] sm:$0xff]
    %v38 = vld [vmem:[%s1 + $0x30] sm:$0xff]
    %v39 = vld [vmem:[%s1 + $0x38] sm:$0xff]
    %v40 = vld [vmem:[%s2] sm:$0xff]
    %v41 = vld [vmem:[%s2 + $0x8] sm:$0xff]
    %v42 = vld [vmem:[%s2 + $0x10] sm:$0xff]
    %v43 = vld [vmem:[%s2 + $0x18] sm:$0xff]
    %v44 = vld [vmem:[%s2 + $0x20] sm:$0xff]
    %v45 = vld [vmem:[%s2 + $0x28] sm:$0xff]
    %v46 = vld [vmem:[%s2 + $0x30] sm:$0xff]
    %v47 = vld [vmem:[%s2 + $0x38] sm:$0xff]
    %49 = vset.pattern.permute.xlu0 0
    %50 = vperm.xlu0 %49, %v40
    %v51 = vpop.permute.xlu0 %50
    %54 = vset.pattern.permute.xlu0 0
    %55 = vperm.xlu0 %54, %v41
    %v56 = vpop.permute.xlu0 %55
    %59 = vset.pattern.permute.xlu0 0
    %60 = vperm.xlu0 %59, %v42
    %v61 = vpop.permute.xlu0 %60
    %64 = vset.pattern.permute.xlu0 0
    %65 = vperm.xlu0 %64, %v43
    %v66 = vpop.permute.xlu0 %65
    %69 = vset.pattern.permute.xlu0 0
    %70 = vperm.xlu0 %69, %v44
    %v71 = vpop.permute.xlu0 %70
    %74 = vset.pattern.permute.xlu0 0
    %75 = vperm.xlu0 %74, %v45
    %v76 = vpop.permute.xlu0 %75
    %79 = vset.pattern.permute.xlu0 0
    %80 = vperm.xlu0 %79, %v46
    %v81 = vpop.permute.xlu0 %80
    %84 = vset.pattern.permute.xlu0 0
    %85 = vperm.xlu0 %84, %v47
    %v86 = vpop.permute.xlu0 %85
    %vm88 = vcmask 261120
    %v90 = vsel %vm88, %v32, 0
    %v93 = vsel %vm88, %v33, 0
    %v96 = vsel %vm88, %v34, 0
    %v99 = vsel %vm88, %v35, 0
    %v102 = vsel %vm88, %v36, 0
    %v105 = vsel %vm88, %v37, 0
    %v108 = vsel %vm88, %v38, 0
    %v111 = vsel %vm88, %v39, 0
    %113 = vmatprep.subr.mxu0 0.0
    %114 = vmatpush1.msra.mxu0 0.0
    %115 = vmatprep.subr.mxu0 0.0
    %116 = vmatpush1.msra.mxu0 0.0
    %117 = vmatprep.subr.mxu0 0.0
    %118 = vmatpush1.msra.mxu0 0.0
    %119 = vmatprep.subr.mxu0 0.0
    %120 = vmatpush1.msra.mxu0 0.0
    %121 = vmatprep.subr.mxu0 0.0
    %122 = vmatpush1.msra.mxu0 0.0
    %123 = vmatprep.subr.mxu0 0.0
    %124 = vmatpush1.msra.mxu0 0.0
    %125 = vmatprep.subr.mxu0 0.0
    %126 = vmatpush1.msra.mxu0 0.0
    %127 = vmatprep.subr.mxu0 0.0
    %128 = vmatpush1.msra.mxu0 0.0
    %129 = vmatprep.subr.mxu0 0.0
    %130 = vmatpush1.msra.mxu0 0.0
    %131 = vmatprep.subr.mxu0 0.0
    %132 = vmatpush1.msra.mxu0 0.0
    %133 = vmatprep.subr.mxu0 0.0
    %134 = vmatpush1.msra.mxu0 0.0
    %135 = vmatprep.subr.mxu0 0.0
    %136 = vmatpush1.msra.mxu0 0.0
    %137 = vmatprep.subr.mxu0 0.0
    %138 = vmatpush1.msra.mxu0 %v31
    %139 = vmatprep.subr.mxu0 0.0
    %140 = vmatpush1.msra.mxu0 %v30
    %141 = vmatprep.subr.mxu0 0.0
    %142 = vmatpush1.msra.mxu0 %v29
    %143 = vmatprep.subr.mxu0 0.0
    %144 = vmatpush1.msra.mxu0 %v28
    %145 = vmatprep.subr.mxu0 0.0
    %146 = vmatpush2.msra.mxu0 0.0
    %147 = vmatprep.subr.mxu0 0.0
    %148 = vmatpush2.msra.mxu0 0.0
    %149 = vmatprep.subr.mxu0 0.0
    %150 = vmatpush2.msra.mxu0 0.0
    %151 = vmatprep.subr.mxu0 0.0
    %152 = vmatpush2.msra.mxu0 0.0
    %153 = vmatprep.subr.mxu0 0.0
    %154 = vmatpush2.msra.mxu0 0.0
    %155 = vmatprep.subr.mxu0 0.0
    %156 = vmatpush2.msra.mxu0 0.0
    %157 = vmatprep.subr.mxu0 0.0
    %158 = vmatpush2.msra.mxu0 0.0
    %159 = vmatprep.subr.mxu0 0.0
    %160 = vmatpush2.msra.mxu0 0.0
    %161 = vmatprep.subr.mxu0 0.0
    %162 = vmatpush2.msra.mxu0 0.0
    %163 = vmatprep.subr.mxu0 0.0
    %164 = vmatpush2.msra.mxu0 0.0
    %165 = vmatprep.subr.mxu0 0.0
    %166 = vmatpush2.msra.mxu0 0.0
    %167 = vmatprep.subr.mxu0 0.0
    %168 = vmatpush2.msra.mxu0 0.0
    %169 = vmatprep.subr.mxu0 0.0
    %170 = vmatpush2.msra.mxu0 0.0
    %171 = vmatprep.subr.mxu0 0.0
    %172 = vmatpush2.msra.mxu0 0.0
    %173 = vmatprep.subr.mxu0 0.0
    %174 = vmatpush2.msra.mxu0 0.0
    %175 = vmatprep.subr.mxu0 0.0
    %176 = vmatpush2.msra.mxu0 0.0
    %177 = vmatprep.mubr.f32.mxu0 0.0
    %178 = vmatmul.mubr.f32.gmra.mxu0 %v90
    %v179 = vpop.f32.mrf.mxu0
    %v180 = vadd.f32 %v51, %v179
    %v181 = vpop.f32.mrf.mxu0
    %182 = vmatprep.mubr.f32.mxu0 0.0
    %183 = vmatmul.mubr.f32.gmra.mxu0 %v93
    %v184 = vpop.f32.mrf.mxu0
    %v185 = vadd.f32 %v56, %v184
    %v186 = vpop.f32.mrf.mxu0
    %187 = vmatprep.mubr.f32.mxu0 0.0
    %188 = vmatmul.mubr.f32.gmra.mxu0 %v96
    %v189 = vpop.f32.mrf.mxu0
    %v190 = vadd.f32 %v61, %v189
    %v191 = vpop.f32.mrf.mxu0
    %192 = vmatprep.mubr.f32.mxu0 0.0
    %193 = vmatmul.mubr.f32.gmra.mxu0 %v99
    %v194 = vpop.f32.mrf.mxu0
    %v195 = vadd.f32 %v66, %v194
    %v196 = vpop.f32.mrf.mxu0
    %197 = vmatprep.mubr.f32.mxu0 0.0
    %198 = vmatmul.mubr.f32.gmra.mxu0 %v102
    %v199 = vpop.f32.mrf.mxu0
    %v200 = vadd.f32 %v71, %v199
    %v201 = vpop.f32.mrf.mxu0
    %202 = vmatprep.mubr.f32.mxu0 0.0
    %203 = vmatmul.mubr.f32.gmra.mxu0 %v105
    %v204 = vpop.f32.mrf.mxu0
    %v205 = vadd.f32 %v76, %v204
    %v206 = vpop.f32.mrf.mxu0
    %207 = vmatprep.mubr.f32.mxu0 0.0
    %208 = vmatmul.mubr.f32.gmra.mxu0 %v108
    %v209 = vpop.f32.mrf.mxu0
    %v210 = vadd.f32 %v81, %v209
    %v211 = vpop.f32.mrf.mxu0
    %212 = vmatprep.mubr.f32.mxu0 0.0
    %213 = vmatmul.mubr.f32.gmra.mxu0 %v111
    %v214 = vpop.f32.mrf.mxu0
    %v215 = vadd.f32 %v86, %v214
    %v216 = vpop.f32.mrf.mxu0
    %217 = vdwg.mxu0
    %v218 = vmax.f32 %v180, 0.0
    %v219 = vmax.f32 %v185, 0.0
    %v220 = vmax.f32 %v190, 0.0
    %v221 = vmax.f32 %v195, 0.0
    %v222 = vmax.f32 %v200, 0.0
    %v223 = vmax.f32 %v205, 0.0
    %v224 = vmax.f32 %v210, 0.0
    %v225 = vmax.f32 %v215, 0.0
    %v226 = vld [vmem:[%s3] sm:$0xff]
    %v227 = vld [vmem:[%s3 + $0x8] sm:$0xff]
    %v228 = vld [vmem:[%s3 + $0x10] sm:$0xff]
    %v229 = vld [vmem:[%s3 + $0x18] sm:$0xff]
    %v230 = vld [vmem:[%s3 + $0x20] sm:$0xff]
    %v231 = vld [vmem:[%s3 + $0x28] sm:$0xff]
    %v232 = vld [vmem:[%s3 + $0x30] sm:$0xff]
    %v233 = vld [vmem:[%s3 + $0x38] sm:$0xff]
    %v234 = vld [vmem:[%s4] sm:$0xff]
    %v235 = vld [vmem:[%s4 + $0x8] sm:$0xff]
    %v236 = vld [vmem:[%s4 + $0x10] sm:$0xff]
    %v237 = vld [vmem:[%s4 + $0x18] sm:$0xff]
    %v238 = vld [vmem:[%s4 + $0x20] sm:$0xff]
    %v239 = vld [vmem:[%s4 + $0x28] sm:$0xff]
    %v240 = vld [vmem:[%s4 + $0x30] sm:$0xff]
    %v241 = vld [vmem:[%s4 + $0x38] sm:$0xff]
    %243 = vset.pattern.permute.xlu0 0
    %244 = vperm.xlu0 %243, %v234
    %v245 = vpop.permute.xlu0 %244
    %248 = vset.pattern.permute.xlu0 0
    %249 = vperm.xlu0 %248, %v235
    %v250 = vpop.permute.xlu0 %249
    %253 = vset.pattern.permute.xlu0 0
    %254 = vperm.xlu0 %253, %v236
    %v255 = vpop.permute.xlu0 %254
    %258 = vset.pattern.permute.xlu0 0
    %259 = vperm.xlu0 %258, %v237
    %v260 = vpop.permute.xlu0 %259
    %263 = vset.pattern.permute.xlu0 0
    %264 = vperm.xlu0 %263, %v238
    %v265 = vpop.permute.xlu0 %264
    %268 = vset.pattern.permute.xlu0 0
    %269 = vperm.xlu0 %268, %v239
    %v270 = vpop.permute.xlu0 %269
    %273 = vset.pattern.permute.xlu0 0
    %274 = vperm.xlu0 %273, %v240
    %v275 = vpop.permute.xlu0 %274
    %278 = vset.pattern.permute.xlu0 0
    %279 = vperm.xlu0 %278, %v241
    %v280 = vpop.permute.xlu0 %279
    %vm282 = vcmask 523264
    %v284 = vsel %vm282, %v226, 0
    %v287 = vsel %vm282, %v227, 0
    %v290 = vsel %vm282, %v228, 0
    %v293 = vsel %vm282, %v229, 0
    %v296 = vsel %vm282, %v230, 0
    %v299 = vsel %vm282, %v231, 0
    %v302 = vsel %vm282, %v232, 0
    %v305 = vsel %vm282, %v233, 0
    %307 = vmatprep.subr.mxu0 0.0
    %308 = vmatpush1.msra.mxu0 0.0
    %309 = vmatprep.subr.mxu0 0.0
    %310 = vmatpush1.msra.mxu0 0.0
    %311 = vmatprep.subr.mxu0 0.0
    %312 = vmatpush1.msra.mxu0 0.0
    %313 = vmatprep.subr.mxu0 0.0
    %314 = vmatpush1.msra.mxu0 0.0
    %315 = vmatprep.subr.mxu0 0.0
    %316 = vmatpush1.msra.mxu0 0.0
    %317 = vmatprep.subr.mxu0 0.0
    %318 = vmatpush1.msra.mxu0 0.0
    %319 = vmatprep.subr.mxu0 0.0
    %320 = vmatpush1.msra.mxu0 0.0
    %321 = vmatprep.subr.mxu0 0.0
    %322 = vmatpush1.msra.mxu0 0.0
    %323 = vmatprep.subr.mxu0 0.0
    %324 = vmatpush1.msra.mxu0 %v225
    %325 = vmatprep.subr.mxu0 0.0
    %326 = vmatpush1.msra.mxu0 %v224
    %327 = vmatprep.subr.mxu0 0.0
    %328 = vmatpush1.msra.mxu0 %v223
    %329 = vmatprep.subr.mxu0 0.0
    %330 = vmatpush1.msra.mxu0 %v222
    %331 = vmatprep.subr.mxu0 0.0
    %332 = vmatpush1.msra.mxu0 %v221
    %333 = vmatprep.subr.mxu0 0.0
    %334 = vmatpush1.msra.mxu0 %v220
    %335 = vmatprep.subr.mxu0 0.0
    %336 = vmatpush1.msra.mxu0 %v219
    %337 = vmatprep.subr.mxu0 0.0
    %338 = vmatpush1.msra.mxu0 %v218
    %339 = vmatprep.subr.mxu0 0.0
    %340 = vmatpush2.msra.mxu0 0.0
    %341 = vmatprep.subr.mxu0 0.0
    %342 = vmatpush2.msra.mxu0 0.0
    %343 = vmatprep.subr.mxu0 0.0
    %344 = vmatpush2.msra.mxu0 0.0
    %345 = vmatprep.subr.mxu0 0.0
    %346 = vmatpush2.msra.mxu0 0.0
    %347 = vmatprep.subr.mxu0 0.0
    %348 = vmatpush2.msra.mxu0 0.0
    %349 = vmatprep.subr.mxu0 0.0
    %350 = vmatpush2.msra.mxu0 0.0
    %351 = vmatprep.subr.mxu0 0.0
    %352 = vmatpush2.msra.mxu0 0.0
    %353 = vmatprep.subr.mxu0 0.0
    %354 = vmatpush2.msra.mxu0 0.0
    %355 = vmatprep.subr.mxu0 0.0
    %356 = vmatpush2.msra.mxu0 0.0
    %357 = vmatprep.subr.mxu0 0.0
    %358 = vmatpush2.msra.mxu0 0.0
    %359 = vmatprep.subr.mxu0 0.0
    %360 = vmatpush2.msra.mxu0 0.0
    %361 = vmatprep.subr.mxu0 0.0
    %362 = vmatpush2.msra.mxu0 0.0
    %363 = vmatprep.subr.mxu0 0.0
    %364 = vmatpush2.msra.mxu0 0.0
    %365 = vmatprep.subr.mxu0 0.0
    %366 = vmatpush2.msra.mxu0 0.0
    %367 = vmatprep.subr.mxu0 0.0
    %368 = vmatpush2.msra.mxu0 0.0
    %369 = vmatprep.subr.mxu0 0.0
    %370 = vmatpush2.msra.mxu0 0.0
    %371 = vmatprep.mubr.f32.mxu0 0.0
    %372 = vmatmul.mubr.f32.gmra.mxu0 %v284
    %v373 = vpop.f32.mrf.mxu0
    %v374 = vadd.f32 %v245, %v373
    %v375 = vpop.f32.mrf.mxu0
    %376 = vmatprep.mubr.f32.mxu0 0.0
    %377 = vmatmul.mubr.f32.gmra.mxu0 %v287
    %v378 = vpop.f32.mrf.mxu0
    %v379 = vadd.f32 %v250, %v378
    %v380 = vpop.f32.mrf.mxu0
    %381 = vmatprep.mubr.f32.mxu0 0.0
    %382 = vmatmul.mubr.f32.gmra.mxu0 %v290
    %v383 = vpop.f32.mrf.mxu0
    %v384 = vadd.f32 %v255, %v383
    %v385 = vpop.f32.mrf.mxu0
    %386 = vmatprep.mubr.f32.mxu0 0.0
    %387 = vmatmul.mubr.f32.gmra.mxu0 %v293
    %v388 = vpop.f32.mrf.mxu0
    %v389 = vadd.f32 %v260, %v388
    %v390 = vpop.f32.mrf.mxu0
    %391 = vmatprep.mubr.f32.mxu0 0.0
    %392 = vmatmul.mubr.f32.gmra.mxu0 %v296
    %v393 = vpop.f32.mrf.mxu0
    %v394 = vadd.f32 %v265, %v393
    %v395 = vpop.f32.mrf.mxu0
    %396 = vmatprep.mubr.f32.mxu0 0.0
    %397 = vmatmul.mubr.f32.gmra.mxu0 %v299
    %v398 = vpop.f32.mrf.mxu0
    %v399 = vadd.f32 %v270, %v398
    %v400 = vpop.f32.mrf.mxu0
    %401 = vmatprep.mubr.f32.mxu0 0.0
    %402 = vmatmul.mubr.f32.gmra.mxu0 %v302
    %v403 = vpop.f32.mrf.mxu0
    %v404 = vadd.f32 %v275, %v403
    %v405 = vpop.f32.mrf.mxu0
    %406 = vmatprep.mubr.f32.mxu0 0.0
    %407 = vmatmul.mubr.f32.gmra.mxu0 %v305
    %v408 = vpop.f32.mrf.mxu0
    %v409 = vadd.f32 %v280, %v408
    %v410 = vpop.f32.mrf.mxu0
    %411 = vdwg.mxu0
    %v412 = vmax.f32 %v374, 0.0
    %v413 = vmax.f32 %v379, 0.0
    %v414 = vmax.f32 %v384, 0.0
    %v415 = vmax.f32 %v389, 0.0
    %v416 = vmax.f32 %v394, 0.0
    %v417 = vmax.f32 %v399, 0.0
    %v418 = vmax.f32 %v404, 0.0
    %v419 = vmax.f32 %v409, 0.0
    %v420 = vld [vmem:[%s5] sm:$0xff]
    %v421 = vld [vmem:[%s5 + $0x8] sm:$0xff]
    %v422 = vld [vmem:[%s5 + $0x10] sm:$0xff]
    %v423 = vld [vmem:[%s5 + $0x18] sm:$0xff]
    %v424 = vld [vmem:[%s5 + $0x20] sm:$0xff]
    %v425 = vld [vmem:[%s5 + $0x28] sm:$0xff]
    %v426 = vld [vmem:[%s5 + $0x30] sm:$0xff]
    %v427 = vld [vmem:[%s5 + $0x38] sm:$0xff]
    %429 = vset.pattern.permute.xlu0 0
    %430 = vperm.xlu0 %429, %v420
    %v431 = vpop.permute.xlu0 %430
    %434 = vset.pattern.permute.xlu0 0
    %435 = vperm.xlu0 %434, %v421
    %v436 = vpop.permute.xlu0 %435
    %439 = vset.pattern.permute.xlu0 0
    %440 = vperm.xlu0 %439, %v422
    %v441 = vpop.permute.xlu0 %440
    %444 = vset.pattern.permute.xlu0 0
    %445 = vperm.xlu0 %444, %v423
    %v446 = vpop.permute.xlu0 %445
    %449 = vset.pattern.permute.xlu0 0
    %450 = vperm.xlu0 %449, %v424
    %v451 = vpop.permute.xlu0 %450
    %454 = vset.pattern.permute.xlu0 0
    %455 = vperm.xlu0 %454, %v425
    %v456 = vpop.permute.xlu0 %455
    %459 = vset.pattern.permute.xlu0 0
    %460 = vperm.xlu0 %459, %v426
    %v461 = vpop.permute.xlu0 %460
    %464 = vset.pattern.permute.xlu0 0
    %465 = vperm.xlu0 %464, %v427
    %v466 = vpop.permute.xlu0 %465
    %v468 = vmul.f32 %v412, %v431
    %v469 = vmul.f32 %v413, %v436
    %v470 = vmul.f32 %v414, %v441
    %v471 = vmul.f32 %v415, %v446
    %v472 = vmul.f32 %v416, %v451
    %v473 = vmul.f32 %v417, %v456
    %v474 = vmul.f32 %v418, %v461
    %v475 = vmul.f32 %v419, %v466
    %v476 = vadd.f32 %v468, %v469
    %v477 = vadd.f32 %v476, %v470
    %v478 = vadd.f32 %v477, %v471
    %v479 = vadd.f32 %v478, %v472
    %v480 = vadd.f32 %v479, %v473
    %v481 = vadd.f32 %v480, %v474
    %v482 = vadd.f32 %v481, %v475
    %v483 = vrot.slane %v482, 4
    %v484 = vadd.f32 %v482, %v483
    %v485 = vrot.slane %v484, 2
    %v486 = vadd.f32 %v484, %v485
    %v487 = vrot.slane %v486, 1
    %v488 = vadd.f32 %v486, %v487
    %s489 = sld [smem:[#allocation2]]
    %v490 = vstv %s489
    %v491 = vadd.f32 %v488, %v490
    %492 = vst [vmem:[#allocation3] sm:$0x1] %v491
    // Predicated region
    $region30: #{tpu_custom_call.1} parent=1 // pred_check
      _
    $region31: #{tpu_custom_call.1} parent=1 // pred_check_branch
      %494 = sbr.rel (0) target = $region33
    $region32: #{tpu_custom_call.1} parent=1 // pred_region
      %s496 = ssub.s32 16, 16
      %497 = vsyncadd [#allocation4], %s496
      %s499 = sshll.u32 [#allocation3], 4
      %s500 = int_to_ptr.vmem [resolvable:$true] %s499
      %502 = dma.vmem_to_hbm [thread:$0]  %s500, 16, %s7, [#allocation4]
    $region33: #{tpu_custom_call.1} parent=1 // pred_fallthru
      _
    // Predicated region
    $region34: #{tpu_custom_call.1} parent=1 // pred_check
      _
    $region35: #{tpu_custom_call.1} parent=1 // pred_check_branch
      %504 = sbr.rel (0) target = $region37
    $region36: #{tpu_custom_call.1} parent=1 // pred_region
      %505 = dma.done [#allocation4], 16
    $region37: #{tpu_custom_call.1} parent=1 // pred_fallthru
      _
    %506 = vsyncpa [#allocation4], 1

</llo_original>
